<compile_context>
chip_gen: v6e
topology: v6e:2x2x1
jax: 0.10.0
libtpu: 0.0.40
codegen_flags: <defaults>
</compile_context>

<pallas_src>
import math

import jax
import jax.numpy as jnp
from jax.experimental import pallas as pl
from jax.experimental.pallas import tpu as pltpu


def _round_up(n, m):
    return ((n + m - 1) // m) * m


def _pick_row_tile(B, S):
    """Rows per grid step: fill the MXU M dim, keep the activation tile bounded.

    Keeps B % TB == 0.  If the batch is split, TB is a multiple of 8 so the
    (TB, 128) output blocks stay sublane-aligned.  On v7x (2 TCs) prefer an
    even number of grid steps so neither core idles on the last step.
    """
    if B * S <= 2048:
        return B
    for tb in range(min(B, 2048 // max(S, 1)), 0, -1):
        if B % tb == 0 and tb % 8 == 0:
            return tb
    return B


# ----------------------------------------------------------------------------
# Fused kernel: one BERT encoder layer + CLS-token MLP head, TB batch rows
# per grid step.
# ----------------------------------------------------------------------------
def bert_and_head_kernel(x_ref, bias_ref,
                         wqkv_ref, bqkv_ref, wo_ref, bo_ref,
                         g1_ref, be1_ref,
                         wf1_ref, bf1_ref, wf2_ref, bf2_ref,
                         g2_ref, be2_ref,
                         w1_ref, b1_ref, w2_ref, b2_ref,
                         cls_ref, pred_ref):
    f32, bf16 = jnp.float32, jnp.bfloat16

    TB, S, D = x_ref.shape
    M = TB * S

    x_bf = x_ref[...].reshape(M, D)      # (TB*S, D) bf16 transport layout
    x = x_bf.astype(f32)                 # f32 copy for residual / LN path
    bias = bias_ref[...]                 # (TB, 1, S) f32 additive key-mask

    # Fused QKV projection: bf16 operands, f32 accumulation on the MXU.
    qkv = jnp.dot(x_bf, wqkv_ref[...],
                  preferred_element_type=f32) + bqkv_ref[...]        # (M, 3D)
    scale = 1.0 / math.sqrt(D)
    # NOTE: at D < 128 these column slices cut inside one lane tile (cheap
    # relayout at toy size); at production D (multiple of 128) they are
    # lane-aligned and free.
    q = (qkv[:, :D] * scale).reshape(TB, S, D)   # fold 1/sqrt(D) into q
    k = qkv[:, D:2 * D].reshape(TB, S, D)
    v = qkv[:, 2 * D:].reshape(TB, S, D)

    # Attention scores: batched contraction over the last dims (no k.T).
    s = jax.lax.dot_general(
        q.astype(bf16), k.astype(bf16),
        dimension_numbers=(((2,), (2,)), ((0,), (0,))),
        preferred_element_type=f32)                                   # (TB,S,S)
    s = s + bias                    # broadcast (TB,1,S) mask over query rows
    s = s - jnp.max(s, axis=-1, keepdims=True)
    p = jnp.exp(s)
    # Softmax denominator on the EUP (free slot) instead of a VALU divide.
    p = p * pl.reciprocal(jnp.sum(p, axis=-1, keepdims=True), approx=True)

    ctx = jax.lax.dot_general(
        p.astype(bf16), v.astype(bf16),
        dimension_numbers=(((2,), (1,)), ((0,), (0,))),
        preferred_element_type=f32)                                   # (TB,S,D)

    attn = jnp.dot(ctx.reshape(M, D).astype(bf16), wo_ref[...],
                   preferred_element_type=f32) + bo_ref[...]          # (M, D)

    # Residual + LayerNorm 1 (f32, fused single-pass mean / mean-of-squares).
    h = x + attn
    mu = jnp.mean(h, axis=-1, keepdims=True)
    var = jnp.mean(h * h, axis=-1, keepdims=True) - mu * mu
    h = (h - mu) * jax.lax.rsqrt(var + 1e-12) * g1_ref[...] + be1_ref[...]

    # Feed-forward (bf16 matmuls, f32 accumulation, bf16 intermediate).
    ff = jnp.dot(h.astype(bf16), wf1_ref[...],
                 preferred_element_type=f32) + bf1_ref[...]
    ff = jnp.maximum(ff, 0.0).astype(bf16)       # halve the (M, d_ff) temp
    ff = jnp.dot(ff, wf2_ref[...],
                 preferred_element_type=f32) + bf2_ref[...]

    # Residual + LayerNorm 2 (f32, fused reductions).
    y = h + ff
    mu2 = jnp.mean(y, axis=-1, keepdims=True)
    var2 = jnp.mean(y * y, axis=-1, keepdims=True) - mu2 * mu2
    y = (y - mu2) * jax.lax.rsqrt(var2 + 1e-12) * g2_ref[...] + be2_ref[...]

    # ---- fused head on the TB CLS rows: Linear -> ReLU -> Dropout(eval) ->
    # Linear, executed as (TB, D) @ (D, d_fc) / (TB, d_fc) @ (d_fc, c_pad).
    cls = y.reshape(TB, S, D)[:, 0, :]                                # (TB, D)
    h1 = jnp.dot(cls.astype(bf16), w1_ref[...],
                 preferred_element_type=f32) + b1_ref[...]
    h1 = jnp.maximum(h1, 0.0)
    # w2/b2 are zero-padded to a 128-wide output block -> lane-dense store.
    pred = jnp.dot(h1.astype(bf16), w2_ref[...],
                   preferred_element_type=f32) + b2_ref[...]          # (TB,Cp)

    d_pad = cls_ref.shape[-1]
    if d_pad > D:   # pad CLS rows to the 128-wide output block (lane-dense).
        cls = jnp.concatenate([cls, jnp.zeros((TB, d_pad - D), f32)], axis=-1)
    cls_ref[...] = cls
    pred_ref[...] = pred


def run_fused_layer_and_head(x, mask_bias, p):
    B, S, D = x.shape
    d_ff = p["wf1"].shape[1]
    d_fc = p["fc_w1"].shape[1]
    c_pad = p["fc_w2p"].shape[1]
    d_pad = _round_up(D, 128)

    TB = _pick_row_tile(B, S)
    nb = B // TB

    def rep(shape):
        # Grid-constant operand: block == full array, index_map always 0,
        # single-buffered (no point double-buffering a constant).
        n = len(shape)
        return pl.BlockSpec(shape, lambda b, _n=n: (0,) * _n,
                            pipeline_mode=pl.Buffered(1))

    in_specs = [
        pl.BlockSpec((TB, S, D), lambda b: (b, 0, 0)),   # x (bf16)
        pl.BlockSpec((TB, 1, S), lambda b: (b, 0, 0)),   # (1,S) mask bias/row
        rep((D, 3 * D)), rep((1, 3 * D)),                # fused Wqkv, bqkv
        rep((D, D)), rep((1, D)),                        # Wo, bo
        rep((1, D)), rep((1, D)),                        # LN1 gamma, beta
        rep((D, d_ff)), rep((1, d_ff)),                  # FFN W1, b1
        rep((d_ff, D)), rep((1, D)),                     # FFN W2, b2
        rep((1, D)), rep((1, D)),                        # LN2 gamma, beta
        rep((D, d_fc)), rep((1, d_fc)),                  # head W1, b1
        rep((d_fc, c_pad)), rep((1, c_pad)),             # head W2, b2 (padded)
    ]
    out_specs = [
        pl.BlockSpec((TB, d_pad), lambda b: (b, 0)),     # padded CLS rows
        pl.BlockSpec((TB, c_pad), lambda b: (b, 0)),     # padded predictions
    ]
    out_shape = (
        jax.ShapeDtypeStruct((B, d_pad), jnp.float32),
        jax.ShapeDtypeStruct((B, c_pad), jnp.float32),
    )
    return pl.pallas_call(
        bert_and_head_kernel,
        out_shape=out_shape,
        grid=(nb,),
        in_specs=in_specs,
        out_specs=out_specs,
        compiler_params=pltpu.CompilerParams(
            dimension_semantics=("parallel",),
            # 48 MiB: above v5e/v6e default scoped limits, below v7x's 64 MiB
            # physical VMEM.  At real BERT dims v7x additionally needs the
            # d_ff tiling noted in the header TODO.
            vmem_limit_bytes=48 * 1024 * 1024),
    )(x, mask_bias,
      p["wqkv"], p["bqkv"], p["wo"], p["bo"],
      p["ln1_g"], p["ln1_b"],
      p["wf1"], p["bf1"], p["wf2"], p["bf2"],
      p["ln2_g"], p["ln2_b"],
      p["fc_w1"], p["fc_b1"], p["fc_w2p"], p["fc_b2p"])


# ----------------------------------------------------------------------------
# Parameter construction (deterministic) and full forward
# ----------------------------------------------------------------------------
def kaiming_uniform(key, fan_in, shape):
    # matches nn.init.kaiming_uniform_ default (a=0, fan_in): U(+/- sqrt(6/fan_in))
    bound = math.sqrt(6.0 / fan_in)
    return jax.random.uniform(key, shape, jnp.float32, -bound, bound)


def make_params(key, vocab, S, D, d_ff, d_fc, n_classes):
    ks = jax.random.split(key, 10)
    scale = 0.02
    f32, bf16 = jnp.float32, jnp.bfloat16

    def nrm(k, shape):
        return scale * jax.random.normal(k, shape, f32)

    c_pad = _round_up(n_classes, 128)
    fc_w2 = kaiming_uniform(ks[9], d_fc, (d_fc, n_classes))

    p = {
        "tok_emb": nrm(ks[0], (vocab, D)),
        "pos_emb": nrm(ks[1], (S, D)),
        # matmul weights stored bf16 (MXU peak path, half the DMA bytes);
        # biases / LN params stay f32 (applied after f32 accumulation).
        # Wq|Wk|Wv fused once here -> single wider MXU matmul in the kernel.
        "wqkv": jnp.concatenate([nrm(ks[2], (D, D)), nrm(ks[3], (D, D)),
                                 nrm(ks[4], (D, D))], axis=1).astype(bf16),
        "bqkv": jnp.zeros((1, 3 * D), f32),
        "wo": nrm(ks[5], (D, D)).astype(bf16),
        "bo": jnp.zeros((1, D), f32),
        "ln1_g": jnp.ones((1, D), f32),
        "ln1_b": jnp.zeros((1, D), f32),
        "wf1": nrm(ks[6], (D, d_ff)).astype(bf16),
        "bf1": jnp.zeros((1, d_ff), f32),
        "wf2": nrm(ks[7], (d_ff, D)).astype(bf16),
        "bf2": jnp.zeros((1, D), f32),
        "ln2_g": jnp.ones((1, D), f32),
        "ln2_b": jnp.zeros((1, D), f32),
        # head: kaiming-uniform weights, zero biases (as in init_weights);
        # output weight/bias pre-padded to a 128-wide lane-dense block.
        "fc_w1": kaiming_uniform(ks[8], D, (D, d_fc)).astype(bf16),
        "fc_b1": jnp.zeros((1, d_fc), f32),
        "fc_w2p": jnp.pad(fc_w2, ((0, 0), (0, c_pad - n_classes))).astype(bf16),
        "fc_b2p": jnp.zeros((1, c_pad), f32),
        "fc_b2": jnp.zeros((1, n_classes), f32),   # unpadded (shape carrier)
    }
    return p


def all_text_bert_forward(params, texts, attention_mask, categoricals, numericals):
    # categoricals / numericals accepted but unused (as in the reference forward).
    del categoricals, numericals
    D = params["pos_emb"].shape[-1]
    n_classes = params["fc_b2"].shape[-1]

    # glue: embedding lookup + position embedding (plain-JAX gather), then
    # bf16 transport into the kernel (halves activation DMA).
    x = jnp.take(params["tok_emb"], texts, axis=0) + params["pos_emb"][None, :, :]
    x = x.astype(jnp.bfloat16)
    # additive key-mask bias kept at O(S) per row; broadcast happens in-kernel.
    neg = ((1.0 - attention_mask.astype(jnp.float32)) * -1e9)[:, None, :]  # (B,1,S)

    cls_p, pred_p = run_fused_layer_and_head(x, neg, params)
    text_cls = cls_p[:, :D]
    text_pred = pred_p[:, :n_classes]
    return text_pred, text_cls


# ----------------------------------------------------------------------------
# Pure-JAX reference for correctness check (mirrors the kernel's bf16-matmul /
# f32-accumulation numerics and LayerNorm formulation at every boundary).
# ----------------------------------------------------------------------------
def reference_forward(p, texts, attention_mask):
    bf16, f32 = jnp.bfloat16, jnp.float32
    D = p["pos_emb"].shape[-1]
    n_classes = p["fc_b2"].shape[-1]
    scale = 1.0 / math.sqrt(D)

    x = (jnp.take(p["tok_emb"], texts, axis=0)
         + p["pos_emb"][None]).astype(bf16).astype(f32)
    xb = x.astype(bf16)
    neg = (1.0 - attention_mask.astype(f32)) * -1e9

    qkv = jnp.einsum("bsd,de->bse", xb, p["wqkv"],
                     preferred_element_type=f32) + p["bqkv"]
    q = qkv[..., :D] * scale
    k = qkv[..., D:2 * D]
    v = qkv[..., 2 * D:]
    s = jnp.einsum("bqd,bkd->bqk", q.astype(bf16), k.astype(bf16),
                   preferred_element_type=f32)
    s = s + neg[:, None, :]
    s = s - s.max(-1, keepdims=True)
    e = jnp.exp(s)
    a = e / e.sum(-1, keepdims=True)
    ctx = jnp.einsum("bqk,bkd->bqd", a.astype(bf16), v.astype(bf16),
                     preferred_element_type=f32)
    attn = jnp.einsum("bsd,de->bse", ctx.astype(bf16), p["wo"],
                      preferred_element_type=f32) + p["bo"]
    h = x + attn
    mu = h.mean(-1, keepdims=True)
    var = (h * h).mean(-1, keepdims=True) - mu * mu
    h = (h - mu) * jax.lax.rsqrt(var + 1e-12) * p["ln1_g"] + p["ln1_b"]
    ff = jnp.einsum("bsd,df->bsf", h.astype(bf16), p["wf1"],
                    preferred_element_type=f32) + p["bf1"]
    ff = jnp.maximum(ff, 0.0).astype(bf16)
    ff = jnp.einsum("bsf,fd->bsd", ff, p["wf2"],
                    preferred_element_type=f32) + p["bf2"]
    y = h + ff
    mu2 = y.mean(-1, keepdims=True)
    var2 = (y * y).mean(-1, keepdims=True) - mu2 * mu2
    y = (y - mu2) * jax.lax.rsqrt(var2 + 1e-12) * p["ln2_g"] + p["ln2_b"]
    cls = y[:, 0, :]
    h1 = jnp.maximum(jnp.dot(cls.astype(bf16), p["fc_w1"],
                             preferred_element_type=f32) + p["fc_b1"], 0.0)
    pred = jnp.dot(h1.astype(bf16), p["fc_w2p"],
                   preferred_element_type=f32) + p["fc_b2p"]
    return pred[:, :n_classes], cls


if __name__ == "__main__":
    B, S, D, d_ff, d_fc, n_classes, vocab = 2, 8, 32, 64, 64, 5, 100

    key = jax.random.PRNGKey(0)
    k_param, k_tok = jax.random.split(key)
    params = make_params(k_param, vocab, S, D, d_ff, d_fc, n_classes)

    texts = jax.random.randint(k_tok, (B, S), 0, vocab, dtype=jnp.int32)
    attention_mask = jnp.ones((B, S), jnp.int32).at[1, -2:].set(0)
    categoricals = jnp.zeros((B, 3), jnp.int32)     # unused by forward
    numericals = jnp.zeros((B, 4), jnp.float32)     # unused by forward

    fwd = jax.jit(all_text_bert_forward)
    text_pred, text_cls = fwd(params, texts, attention_mask, categoricals, numericals)
    jax.block_until_ready((text_pred, text_cls))

    ref_pred, ref_cls = reference_forward(params, texts, attention_mask)
    assert text_pred.shape == (B, n_classes) and text_cls.shape == (B, D)
    assert jnp.allclose(text_pred, ref_pred, atol=5e-3, rtol=5e-3)
    assert jnp.allclose(text_cls, ref_cls, atol=5e-3, rtol=5e-3)

    print("KERNEL_OK")
</pallas_src>

<mosaic_0001>
module attributes {stable_mosaic.version = 11 : i64} {
  func.func @bert_and_head_kernel(%arg0: i32, %arg1: memref<2x8x32xbf16, #tpu.memory_space<vmem>>, %arg2: memref<2x1x8xf32, #tpu.memory_space<vmem>>, %arg3: memref<32x96xbf16, #tpu.memory_space<vmem>>, %arg4: memref<1x96xf32, #tpu.memory_space<vmem>>, %arg5: memref<32x32xbf16, #tpu.memory_space<vmem>>, %arg6: memref<1x32xf32, #tpu.memory_space<vmem>>, %arg7: memref<1x32xf32, #tpu.memory_space<vmem>>, %arg8: memref<1x32xf32, #tpu.memory_space<vmem>>, %arg9: memref<32x64xbf16, #tpu.memory_space<vmem>>, %arg10: memref<1x64xf32, #tpu.memory_space<vmem>>, %arg11: memref<64x32xbf16, #tpu.memory_space<vmem>>, %arg12: memref<1x32xf32, #tpu.memory_space<vmem>>, %arg13: memref<1x32xf32, #tpu.memory_space<vmem>>, %arg14: memref<1x32xf32, #tpu.memory_space<vmem>>, %arg15: memref<32x64xbf16, #tpu.memory_space<vmem>>, %arg16: memref<1x64xf32, #tpu.memory_space<vmem>>, %arg17: memref<64x128xbf16, #tpu.memory_space<vmem>>, %arg18: memref<1x128xf32, #tpu.memory_space<vmem>>, %arg19: memref<2x128xf32, #tpu.memory_space<vmem>>, %arg20: memref<2x128xf32, #tpu.memory_space<vmem>>) attributes {dimension_semantics = [#tpu.dimension_semantics<parallel>], iteration_bounds = array<i64: 1>, scalar_prefetch = 0 : i64, scratch_operands = 0 : i64, tpu.core_type = #tpu.core_type<tc>, window_params = [{transform_indices = @transform_0, window_bounds = array<i64: 2, 8, 32>}, {transform_indices = @transform_1, window_bounds = array<i64: 2, 1, 8>}, {pipeline_mode = #tpu.pipeline_mode<synchronous>, transform_indices = @transform_2, window_bounds = array<i64: 32, 96>}, {pipeline_mode = #tpu.pipeline_mode<synchronous>, transform_indices = @transform_3, window_bounds = array<i64: 1, 96>}, {pipeline_mode = #tpu.pipeline_mode<synchronous>, transform_indices = @transform_4, window_bounds = array<i64: 32, 32>}, {pipeline_mode = #tpu.pipeline_mode<synchronous>, transform_indices = @transform_5, window_bounds = array<i64: 1, 32>}, {pipeline_mode = #tpu.pipeline_mode<synchronous>, transform_indices = @transform_6, window_bounds = array<i64: 1, 32>}, {pipeline_mode = #tpu.pipeline_mode<synchronous>, transform_indices = @transform_7, window_bounds = array<i64: 1, 32>}, {pipeline_mode = #tpu.pipeline_mode<synchronous>, transform_indices = @transform_8, window_bounds = array<i64: 32, 64>}, {pipeline_mode = #tpu.pipeline_mode<synchronous>, transform_indices = @transform_9, window_bounds = array<i64: 1, 64>}, {pipeline_mode = #tpu.pipeline_mode<synchronous>, transform_indices = @transform_10, window_bounds = array<i64: 64, 32>}, {pipeline_mode = #tpu.pipeline_mode<synchronous>, transform_indices = @transform_11, window_bounds = array<i64: 1, 32>}, {pipeline_mode = #tpu.pipeline_mode<synchronous>, transform_indices = @transform_12, window_bounds = array<i64: 1, 32>}, {pipeline_mode = #tpu.pipeline_mode<synchronous>, transform_indices = @transform_13, window_bounds = array<i64: 1, 32>}, {pipeline_mode = #tpu.pipeline_mode<synchronous>, transform_indices = @transform_14, window_bounds = array<i64: 32, 64>}, {pipeline_mode = #tpu.pipeline_mode<synchronous>, transform_indices = @transform_15, window_bounds = array<i64: 1, 64>}, {pipeline_mode = #tpu.pipeline_mode<synchronous>, transform_indices = @transform_16, window_bounds = array<i64: 64, 128>}, {pipeline_mode = #tpu.pipeline_mode<synchronous>, transform_indices = @transform_17, window_bounds = array<i64: 1, 128>}, {transform_indices = @transform_18, window_bounds = array<i64: 2, 128>}, {transform_indices = @transform_19, window_bounds = array<i64: 2, 128>}]} {
    %c0 = arith.constant 0 : index
    %c0_0 = arith.constant 0 : index
    %c0_1 = arith.constant 0 : index
    %0 = vector.load %arg1[%c0, %c0_0, %c0_1] : memref<2x8x32xbf16, #tpu.memory_space<vmem>>, vector<2x8x32xbf16>
    %1 = vector.shape_cast %0 : vector<2x8x32xbf16> to vector<16x32xbf16>
    %2 = arith.extf %1 : vector<16x32xbf16> to vector<16x32xf32>
    %c0_2 = arith.constant 0 : index
    %c0_3 = arith.constant 0 : index
    %c0_4 = arith.constant 0 : index
    %3 = vector.load %arg2[%c0_2, %c0_3, %c0_4] : memref<2x1x8xf32, #tpu.memory_space<vmem>>, vector<2x1x8xf32>
    %c0_5 = arith.constant 0 : index
    %c0_6 = arith.constant 0 : index
    %4 = vector.load %arg3[%c0_5, %c0_6] : memref<32x96xbf16, #tpu.memory_space<vmem>>, vector<32x96xbf16>
    %cst = arith.constant dense<0.000000e+00> : vector<16x96xf32>
    %5 = tpu.matmul %1, %4, %cst {dimension_numbers = #tpu.dot_dimension_numbers<[1], [0], [0], [1], [0, 0, 1, 1], [], []>} : vector<16x32xbf16>, vector<32x96xbf16>, vector<16x96xf32> -> vector<16x96xf32>
    %c0_7 = arith.constant 0 : index
    %c0_8 = arith.constant 0 : index
    %6 = vector.load %arg4[%c0_7, %c0_8] : memref<1x96xf32, #tpu.memory_space<vmem>>, vector<1x96xf32>
    %7 = vector.broadcast %6 : vector<1x96xf32> to vector<16x96xf32>
    %8 = arith.addf %5, %7 : vector<16x96xf32>
    %9 = vector.extract_strided_slice %8 {offsets = [0, 0], sizes = [16, 32], strides = [1, 1]} : vector<16x96xf32> to vector<16x32xf32>
    %cst_9 = arith.constant 0.176776692 : f32
    %10 = vector.broadcast %cst_9 : f32 to vector<16x32xf32>
    %11 = arith.mulf %9, %10 : vector<16x32xf32>
    %12 = vector.shape_cast %11 : vector<16x32xf32> to vector<2x8x32xf32>
    %13 = vector.extract_strided_slice %8 {offsets = [0, 32], sizes = [16, 32], strides = [1, 1]} : vector<16x96xf32> to vector<16x32xf32>
    %14 = vector.shape_cast %13 : vector<16x32xf32> to vector<2x8x32xf32>
    %15 = vector.extract_strided_slice %8 {offsets = [0, 64], sizes = [16, 32], strides = [1, 1]} : vector<16x96xf32> to vector<16x32xf32>
    %16 = vector.shape_cast %15 : vector<16x32xf32> to vector<2x8x32xf32>
    %17 = arith.truncf %12 : vector<2x8x32xf32> to vector<2x8x32xbf16>
    %18 = arith.truncf %14 : vector<2x8x32xf32> to vector<2x8x32xbf16>
    %cst_10 = arith.constant dense<0.000000e+00> : vector<2x8x8xf32>
    %19 = tpu.matmul %17, %18, %cst_10 {dimension_numbers = #tpu.dot_dimension_numbers<[2], [2], [1], [1], [0, 0, 0, 1, 1, 1], [0], [0]>} : vector<2x8x32xbf16>, vector<2x8x32xbf16>, vector<2x8x8xf32> -> vector<2x8x8xf32>
    %20 = vector.broadcast %3 : vector<2x1x8xf32> to vector<2x8x8xf32>
    %21 = arith.addf %19, %20 : vector<2x8x8xf32>
    %cst_11 = arith.constant dense<0xFF800000> : vector<2x8xf32>
    %22 = vector.multi_reduction <maximumf>, %21, %cst_11 [2] : vector<2x8x8xf32> to vector<2x8xf32>
    %23 = vector.shape_cast %22 : vector<2x8xf32> to vector<2x8x1xf32>
    %24 = vector.broadcast %23 : vector<2x8x1xf32> to vector<2x8x8xf32>
    %25 = arith.subf %21, %24 : vector<2x8x8xf32>
    %26 = math.exp %25 : vector<2x8x8xf32>
    %cst_12 = arith.constant dense<0.000000e+00> : vector<2x8xf32>
    %27 = vector.multi_reduction <add>, %26, %cst_12 [2] : vector<2x8x8xf32> to vector<2x8xf32>
    %28 = vector.shape_cast %27 : vector<2x8xf32> to vector<2x8x1xf32>
    %29 = tpu.reciprocal %28 {approx = true} : vector<2x8x1xf32> -> vector<2x8x1xf32>
    %30 = vector.broadcast %29 : vector<2x8x1xf32> to vector<2x8x8xf32>
    %31 = arith.mulf %26, %30 : vector<2x8x8xf32>
    %32 = arith.truncf %31 : vector<2x8x8xf32> to vector<2x8x8xbf16>
    %33 = arith.truncf %16 : vector<2x8x32xf32> to vector<2x8x32xbf16>
    %cst_13 = arith.constant dense<0.000000e+00> : vector<2x8x32xf32>
    %34 = tpu.matmul %32, %33, %cst_13 {dimension_numbers = #tpu.dot_dimension_numbers<[2], [1], [1], [2], [0, 0, 0, 1, 1, 2], [0], [0]>} : vector<2x8x8xbf16>, vector<2x8x32xbf16>, vector<2x8x32xf32> -> vector<2x8x32xf32>
    %35 = vector.shape_cast %34 : vector<2x8x32xf32> to vector<16x32xf32>
    %36 = arith.truncf %35 : vector<16x32xf32> to vector<16x32xbf16>
    %c0_14 = arith.constant 0 : index
    %c0_15 = arith.constant 0 : index
    %37 = vector.load %arg5[%c0_14, %c0_15] : memref<32x32xbf16, #tpu.memory_space<vmem>>, vector<32x32xbf16>
    %cst_16 = arith.constant dense<0.000000e+00> : vector<16x32xf32>
    %38 = tpu.matmul %36, %37, %cst_16 {dimension_numbers = #tpu.dot_dimension_numbers<[1], [0], [0], [1], [0, 0, 1, 1], [], []>} : vector<16x32xbf16>, vector<32x32xbf16>, vector<16x32xf32> -> vector<16x32xf32>
    %c0_17 = arith.constant 0 : index
    %c0_18 = arith.constant 0 : index
    %39 = vector.load %arg6[%c0_17, %c0_18] : memref<1x32xf32, #tpu.memory_space<vmem>>, vector<1x32xf32>
    %40 = vector.broadcast %39 : vector<1x32xf32> to vector<16x32xf32>
    %41 = arith.addf %38, %40 : vector<16x32xf32>
    %42 = arith.addf %2, %41 : vector<16x32xf32>
    %cst_19 = arith.constant dense<0.000000e+00> : vector<16xf32>
    %43 = vector.multi_reduction <add>, %42, %cst_19 [1] : vector<16x32xf32> to vector<16xf32>
    %44 = vector.shape_cast %43 : vector<16xf32> to vector<16x1xf32>
    %cst_20 = arith.constant 3.200000e+01 : f32
    %45 = vector.broadcast %cst_20 : f32 to vector<16x1xf32>
    %46 = arith.divf %44, %45 : vector<16x1xf32>
    %47 = arith.mulf %42, %42 : vector<16x32xf32>
    %cst_21 = arith.constant dense<0.000000e+00> : vector<16xf32>
    %48 = vector.multi_reduction <add>, %47, %cst_21 [1] : vector<16x32xf32> to vector<16xf32>
    %49 = vector.shape_cast %48 : vector<16xf32> to vector<16x1xf32>
    %cst_22 = arith.constant 3.200000e+01 : f32
    %50 = vector.broadcast %cst_22 : f32 to vector<16x1xf32>
    %51 = arith.divf %49, %50 : vector<16x1xf32>
    %52 = arith.mulf %46, %46 : vector<16x1xf32>
    %53 = arith.subf %51, %52 : vector<16x1xf32>
    %54 = vector.broadcast %46 : vector<16x1xf32> to vector<16x32xf32>
    %55 = arith.subf %42, %54 : vector<16x32xf32>
    %cst_23 = arith.constant 9.99999996E-13 : f32
    %56 = vector.broadcast %cst_23 : f32 to vector<16x1xf32>
    %57 = arith.addf %53, %56 : vector<16x1xf32>
    %58 = math.rsqrt %57 : vector<16x1xf32>
    %59 = vector.broadcast %58 : vector<16x1xf32> to vector<16x32xf32>
    %60 = arith.mulf %55, %59 : vector<16x32xf32>
    %c0_24 = arith.constant 0 : index
    %c0_25 = arith.constant 0 : index
    %61 = vector.load %arg7[%c0_24, %c0_25] : memref<1x32xf32, #tpu.memory_space<vmem>>, vector<1x32xf32>
    %62 = vector.broadcast %61 : vector<1x32xf32> to vector<16x32xf32>
    %63 = arith.mulf %60, %62 : vector<16x32xf32>
    %c0_26 = arith.constant 0 : index
    %c0_27 = arith.constant 0 : index
    %64 = vector.load %arg8[%c0_26, %c0_27] : memref<1x32xf32, #tpu.memory_space<vmem>>, vector<1x32xf32>
    %65 = vector.broadcast %64 : vector<1x32xf32> to vector<16x32xf32>
    %66 = arith.addf %63, %65 : vector<16x32xf32>
    %67 = arith.truncf %66 : vector<16x32xf32> to vector<16x32xbf16>
    %c0_28 = arith.constant 0 : index
    %c0_29 = arith.constant 0 : index
    %68 = vector.load %arg9[%c0_28, %c0_29] : memref<32x64xbf16, #tpu.memory_space<vmem>>, vector<32x64xbf16>
    %cst_30 = arith.constant dense<0.000000e+00> : vector<16x64xf32>
    %69 = tpu.matmul %67, %68, %cst_30 {dimension_numbers = #tpu.dot_dimension_numbers<[1], [0], [0], [1], [0, 0, 1, 1], [], []>} : vector<16x32xbf16>, vector<32x64xbf16>, vector<16x64xf32> -> vector<16x64xf32>
    %c0_31 = arith.constant 0 : index
    %c0_32 = arith.constant 0 : index
    %70 = vector.load %arg10[%c0_31, %c0_32] : memref<1x64xf32, #tpu.memory_space<vmem>>, vector<1x64xf32>
    %71 = vector.broadcast %70 : vector<1x64xf32> to vector<16x64xf32>
    %72 = arith.addf %69, %71 : vector<16x64xf32>
    %cst_33 = arith.constant 0.000000e+00 : f32
    %73 = vector.broadcast %cst_33 : f32 to vector<16x64xf32>
    %74 = arith.maximumf %72, %73 : vector<16x64xf32>
    %75 = arith.truncf %74 : vector<16x64xf32> to vector<16x64xbf16>
    %c0_34 = arith.constant 0 : index
    %c0_35 = arith.constant 0 : index
    %76 = vector.load %arg11[%c0_34, %c0_35] : memref<64x32xbf16, #tpu.memory_space<vmem>>, vector<64x32xbf16>
    %cst_36 = arith.constant dense<0.000000e+00> : vector<16x32xf32>
    %77 = tpu.matmul %75, %76, %cst_36 {dimension_numbers = #tpu.dot_dimension_numbers<[1], [0], [0], [1], [0, 0, 1, 1], [], []>} : vector<16x64xbf16>, vector<64x32xbf16>, vector<16x32xf32> -> vector<16x32xf32>
    %c0_37 = arith.constant 0 : index
    %c0_38 = arith.constant 0 : index
    %78 = vector.load %arg12[%c0_37, %c0_38] : memref<1x32xf32, #tpu.memory_space<vmem>>, vector<1x32xf32>
    %79 = vector.broadcast %78 : vector<1x32xf32> to vector<16x32xf32>
    %80 = arith.addf %77, %79 : vector<16x32xf32>
    %81 = arith.addf %66, %80 : vector<16x32xf32>
    %cst_39 = arith.constant dense<0.000000e+00> : vector<16xf32>
    %82 = vector.multi_reduction <add>, %81, %cst_39 [1] : vector<16x32xf32> to vector<16xf32>
    %83 = vector.shape_cast %82 : vector<16xf32> to vector<16x1xf32>
    %cst_40 = arith.constant 3.200000e+01 : f32
    %84 = vector.broadcast %cst_40 : f32 to vector<16x1xf32>
    %85 = arith.divf %83, %84 : vector<16x1xf32>
    %86 = arith.mulf %81, %81 : vector<16x32xf32>
    %cst_41 = arith.constant dense<0.000000e+00> : vector<16xf32>
    %87 = vector.multi_reduction <add>, %86, %cst_41 [1] : vector<16x32xf32> to vector<16xf32>
    %88 = vector.shape_cast %87 : vector<16xf32> to vector<16x1xf32>
    %cst_42 = arith.constant 3.200000e+01 : f32
    %89 = vector.broadcast %cst_42 : f32 to vector<16x1xf32>
    %90 = arith.divf %88, %89 : vector<16x1xf32>
    %91 = arith.mulf %85, %85 : vector<16x1xf32>
    %92 = arith.subf %90, %91 : vector<16x1xf32>
    %93 = vector.broadcast %85 : vector<16x1xf32> to vector<16x32xf32>
    %94 = arith.subf %81, %93 : vector<16x32xf32>
    %cst_43 = arith.constant 9.99999996E-13 : f32
    %95 = vector.broadcast %cst_43 : f32 to vector<16x1xf32>
    %96 = arith.addf %92, %95 : vector<16x1xf32>
    %97 = math.rsqrt %96 : vector<16x1xf32>
    %98 = vector.broadcast %97 : vector<16x1xf32> to vector<16x32xf32>
    %99 = arith.mulf %94, %98 : vector<16x32xf32>
    %c0_44 = arith.constant 0 : index
    %c0_45 = arith.constant 0 : index
    %100 = vector.load %arg13[%c0_44, %c0_45] : memref<1x32xf32, #tpu.memory_space<vmem>>, vector<1x32xf32>
    %101 = vector.broadcast %100 : vector<1x32xf32> to vector<16x32xf32>
    %102 = arith.mulf %99, %101 : vector<16x32xf32>
    %c0_46 = arith.constant 0 : index
    %c0_47 = arith.constant 0 : index
    %103 = vector.load %arg14[%c0_46, %c0_47] : memref<1x32xf32, #tpu.memory_space<vmem>>, vector<1x32xf32>
    %104 = vector.broadcast %103 : vector<1x32xf32> to vector<16x32xf32>
    %105 = arith.addf %102, %104 : vector<16x32xf32>
    %106 = vector.shape_cast %105 : vector<16x32xf32> to vector<2x8x32xf32>
    %107 = vector.extract_strided_slice %106 {offsets = [0, 0, 0], sizes = [2, 1, 32], strides = [1, 1, 1]} : vector<2x8x32xf32> to vector<2x1x32xf32>
    %108 = vector.shape_cast %107 : vector<2x1x32xf32> to vector<2x32xf32>
    %109 = arith.truncf %108 : vector<2x32xf32> to vector<2x32xbf16>
    %c0_48 = arith.constant 0 : index
    %c0_49 = arith.constant 0 : index
    %110 = vector.load %arg15[%c0_48, %c0_49] : memref<32x64xbf16, #tpu.memory_space<vmem>>, vector<32x64xbf16>
    %cst_50 = arith.constant dense<0.000000e+00> : vector<2x64xf32>
    %111 = tpu.matmul %109, %110, %cst_50 {dimension_numbers = #tpu.dot_dimension_numbers<[1], [0], [0], [1], [0, 0, 1, 1], [], []>} : vector<2x32xbf16>, vector<32x64xbf16>, vector<2x64xf32> -> vector<2x64xf32>
    %c0_51 = arith.constant 0 : index
    %c0_52 = arith.constant 0 : index
    %112 = vector.load %arg16[%c0_51, %c0_52] : memref<1x64xf32, #tpu.memory_space<vmem>>, vector<1x64xf32>
    %113 = vector.broadcast %112 : vector<1x64xf32> to vector<2x64xf32>
    %114 = arith.addf %111, %113 : vector<2x64xf32>
    %cst_53 = arith.constant 0.000000e+00 : f32
    %115 = vector.broadcast %cst_53 : f32 to vector<2x64xf32>
    %116 = arith.maximumf %114, %115 : vector<2x64xf32>
    %117 = arith.truncf %116 : vector<2x64xf32> to vector<2x64xbf16>
    %c0_54 = arith.constant 0 : index
    %c0_55 = arith.constant 0 : index
    %118 = vector.load %arg17[%c0_54, %c0_55] : memref<64x128xbf16, #tpu.memory_space<vmem>>, vector<64x128xbf16>
    %cst_56 = arith.constant dense<0.000000e+00> : vector<2x128xf32>
    %119 = tpu.matmul %117, %118, %cst_56 {dimension_numbers = #tpu.dot_dimension_numbers<[1], [0], [0], [1], [0, 0, 1, 1], [], []>} : vector<2x64xbf16>, vector<64x128xbf16>, vector<2x128xf32> -> vector<2x128xf32>
    %c0_57 = arith.constant 0 : index
    %c0_58 = arith.constant 0 : index
    %120 = vector.load %arg18[%c0_57, %c0_58] : memref<1x128xf32, #tpu.memory_space<vmem>>, vector<1x128xf32>
    %121 = vector.broadcast %120 : vector<1x128xf32> to vector<2x128xf32>
    %122 = arith.addf %119, %121 : vector<2x128xf32>
    %cst_59 = arith.constant 0.000000e+00 : f32
    %123 = vector.broadcast %cst_59 : f32 to vector<2x96xf32>
    %124 = tpu.concatenate %108, %123 in 1 : vector<2x32xf32>, vector<2x96xf32> -> vector<2x128xf32>
    %c0_60 = arith.constant 0 : index
    %c0_61 = arith.constant 0 : index
    %125 = vector.load %arg19[%c0_60, %c0_61] : memref<2x128xf32, #tpu.memory_space<vmem>>, vector<2x128xf32>
    tpu.vector_store %arg19[%c0_60, %c0_61], %124 {strides = array<i32>} : memref<2x128xf32, #tpu.memory_space<vmem>>, vector<2x128xf32>,
    %c0_62 = arith.constant 0 : index
    %c0_63 = arith.constant 0 : index
    %126 = vector.load %arg20[%c0_62, %c0_63] : memref<2x128xf32, #tpu.memory_space<vmem>>, vector<2x128xf32>
    tpu.vector_store %arg20[%c0_62, %c0_63], %122 {strides = array<i32>} : memref<2x128xf32, #tpu.memory_space<vmem>>, vector<2x128xf32>,
    return
  }
  func.func @transform_0(%arg0: i32) -> (i32, i32, i32) {
    %c0_i32 = arith.constant 0 : i32
    %c0_i32_0 = arith.constant 0 : i32
    %c0_i32_1 = arith.constant 0 : i32
    return %arg0, %c0_i32, %c0_i32_0 : i32, i32, i32
  }
  func.func @transform_1(%arg0: i32) -> (i32, i32, i32) {
    %c0_i32 = arith.constant 0 : i32
    %c0_i32_0 = arith.constant 0 : i32
    %c0_i32_1 = arith.constant 0 : i32
    return %arg0, %c0_i32, %c0_i32_0 : i32, i32, i32
  }
  func.func @transform_2(%arg0: i32) -> (i32, i32) {
    %c0_i32 = arith.constant 0 : i32
    %c0_i32_0 = arith.constant 0 : i32
    %c0_i32_1 = arith.constant 0 : i32
    return %c0_i32, %c0_i32_0 : i32, i32
  }
  func.func @transform_3(%arg0: i32) -> (i32, i32) {
    %c0_i32 = arith.constant 0 : i32
    %c0_i32_0 = arith.constant 0 : i32
    %c0_i32_1 = arith.constant 0 : i32
    return %c0_i32, %c0_i32_0 : i32, i32
  }
  func.func @transform_4(%arg0: i32) -> (i32, i32) {
    %c0_i32 = arith.constant 0 : i32
    %c0_i32_0 = arith.constant 0 : i32
    %c0_i32_1 = arith.constant 0 : i32
    return %c0_i32, %c0_i32_0 : i32, i32
  }
  func.func @transform_5(%arg0: i32) -> (i32, i32) {
    %c0_i32 = arith.constant 0 : i32
    %c0_i32_0 = arith.constant 0 : i32
    %c0_i32_1 = arith.constant 0 : i32
    return %c0_i32, %c0_i32_0 : i32, i32
  }
  func.func @transform_6(%arg0: i32) -> (i32, i32) {
    %c0_i32 = arith.constant 0 : i32
    %c0_i32_0 = arith.constant 0 : i32
    %c0_i32_1 = arith.constant 0 : i32
    return %c0_i32, %c0_i32_0 : i32, i32
  }
  func.func @transform_7(%arg0: i32) -> (i32, i32) {
    %c0_i32 = arith.constant 0 : i32
    %c0_i32_0 = arith.constant 0 : i32
    %c0_i32_1 = arith.constant 0 : i32
    return %c0_i32, %c0_i32_0 : i32, i32
  }
  func.func @transform_8(%arg0: i32) -> (i32, i32) {
    %c0_i32 = arith.constant 0 : i32
    %c0_i32_0 = arith.constant 0 : i32
    %c0_i32_1 = arith.constant 0 : i32
    return %c0_i32, %c0_i32_0 : i32, i32
  }
  func.func @transform_9(%arg0: i32) -> (i32, i32) {
    %c0_i32 = arith.constant 0 : i32
    %c0_i32_0 = arith.constant 0 : i32
    %c0_i32_1 = arith.constant 0 : i32
    return %c0_i32, %c0_i32_0 : i32, i32
  }
  func.func @transform_10(%arg0: i32) -> (i32, i32) {
    %c0_i32 = arith.constant 0 : i32
    %c0_i32_0 = arith.constant 0 : i32
    %c0_i32_1 = arith.constant 0 : i32
    return %c0_i32, %c0_i32_0 : i32, i32
  }
  func.func @transform_11(%arg0: i32) -> (i32, i32) {
    %c0_i32 = arith.constant 0 : i32
    %c0_i32_0 = arith.constant 0 : i32
    %c0_i32_1 = arith.constant 0 : i32
    return %c0_i32, %c0_i32_0 : i32, i32
  }
  func.func @transform_12(%arg0: i32) -> (i32, i32) {
    %c0_i32 = arith.constant 0 : i32
    %c0_i32_0 = arith.constant 0 : i32
    %c0_i32_1 = arith.constant 0 : i32
    return %c0_i32, %c0_i32_0 : i32, i32
  }
  func.func @transform_13(%arg0: i32) -> (i32, i32) {
    %c0_i32 = arith.constant 0 : i32
    %c0_i32_0 = arith.constant 0 : i32
    %c0_i32_1 = arith.constant 0 : i32
    return %c0_i32, %c0_i32_0 : i32, i32
  }
  func.func @transform_14(%arg0: i32) -> (i32, i32) {
    %c0_i32 = arith.constant 0 : i32
    %c0_i32_0 = arith.constant 0 : i32
    %c0_i32_1 = arith.constant 0 : i32
    return %c0_i32, %c0_i32_0 : i32, i32
  }
  func.func @transform_15(%arg0: i32) -> (i32, i32) {
    %c0_i32 = arith.constant 0 : i32
    %c0_i32_0 = arith.constant 0 : i32
    %c0_i32_1 = arith.constant 0 : i32
    return %c0_i32, %c0_i32_0 : i32, i32
  }
  func.func @transform_16(%arg0: i32) -> (i32, i32) {
    %c0_i32 = arith.constant 0 : i32
    %c0_i32_0 = arith.constant 0 : i32
    %c0_i32_1 = arith.constant 0 : i32
    return %c0_i32, %c0_i32_0 : i32, i32
  }
  func.func @transform_17(%arg0: i32) -> (i32, i32) {
    %c0_i32 = arith.constant 0 : i32
    %c0_i32_0 = arith.constant 0 : i32
    %c0_i32_1 = arith.constant 0 : i32
    return %c0_i32, %c0_i32_0 : i32, i32
  }
  func.func @transform_18(%arg0: i32) -> (i32, i32) {
    %c0_i32 = arith.constant 0 : i32
    %c0_i32_0 = arith.constant 0 : i32
    return %arg0, %c0_i32 : i32, i32
  }
  func.func @transform_19(%arg0: i32) -> (i32, i32) {
    %c0_i32 = arith.constant 0 : i32
    %c0_i32_0 = arith.constant 0 : i32
    return %arg0, %c0_i32 : i32, i32
  }
}

</mosaic_0001>

<llo_original>
// kernel: all_text_bert_forward.1
$region0: #{all_text_bert_forward.1}
  #allocation0 [shape = 'u32[]', space=smem, size = 0x4, offset = 0x4, fixed_abs, tag = 'smem constant byte address 0x4 - core index']
  #allocation1 [shape = 'u32[144,128]{1,0:T(1,128)}', space=vmem, size = 0x12000, scoped, tag = 'internal scratch']
  %s0 = inlined_call_operand.vmem [shape: bf16[2,8,32], index: 0, kind: input, shape index: {}]
  %s1 = inlined_call_operand.vmem [shape: f32[2,1,8], index: 1, kind: input, shape index: {}]
  %s2 = inlined_call_operand.vmem [shape: bf16[32,96], index: 2, kind: input, shape index: {}]
  %s3 = inlined_call_operand.vmem [shape: f32[1,96], index: 3, kind: input, shape index: {}]
  %s4 = inlined_call_operand.vmem [shape: bf16[32,32], index: 4, kind: input, shape index: {}]
  %s5 = inlined_call_operand.vmem [shape: f32[1,32], index: 5, kind: input, shape index: {}]
  %s6 = inlined_call_operand.vmem [shape: f32[1,32], index: 6, kind: input, shape index: {}]
  %s7 = inlined_call_operand.vmem [shape: f32[1,32], index: 7, kind: input, shape index: {}]
  %s8 = inlined_call_operand.vmem [shape: bf16[32,64], index: 8, kind: input, shape index: {}]
  %s9 = inlined_call_operand.vmem [shape: f32[1,64], index: 9, kind: input, shape index: {}]
  %s10 = inlined_call_operand.vmem [shape: bf16[64,32], index: 10, kind: input, shape index: {}]
  %s11 = inlined_call_operand.vmem [shape: f32[1,32], index: 11, kind: input, shape index: {}]
  %s12 = inlined_call_operand.vmem [shape: f32[1,32], index: 12, kind: input, shape index: {}]
  %s13 = inlined_call_operand.vmem [shape: f32[1,32], index: 13, kind: input, shape index: {}]
  %s14 = inlined_call_operand.vmem [shape: bf16[32,64], index: 14, kind: input, shape index: {}]
  %s15 = inlined_call_operand.vmem [shape: f32[1,64], index: 15, kind: input, shape index: {}]
  %s16 = inlined_call_operand.vmem [shape: bf16[64,128], index: 16, kind: input, shape index: {}]
  %s17 = inlined_call_operand.vmem [shape: f32[1,128], index: 17, kind: input, shape index: {}]
  %s18 = inlined_call_operand.hbm [shape: f32[2,128], index: 18, kind: output, shape index: {0}]
  %s19 = inlined_call_operand.hbm [shape: f32[2,128], index: 19, kind: output, shape index: {1}]
  %20 = xla_tuple %s18, %s19
  %s21 = sld [smem:[#allocation0]]
  $region90: #{all_text_bert_forward.1} parent=0
    _
  %s23 = ssub.s32 1, %s21
  %s24 = scalar_select 0, %s23, %s21
  $region1: #{all_text_bert_forward.1} parent=0
    #allocation2 [shape = 'u8[1024]{0}', space=vmem, size = 0x400, scoped, tag = 'output window, operand 0, single buffered']
    #allocation3 [shape = 's32[1]{0}', space=sflag, size = 0x4, scoped, tag = 'scoped memory for all_text_bert_forward.1']
    #allocation4 [shape = 'u8[1024]{0}', space=vmem, size = 0x400, scoped, tag = 'output window, operand 1, single buffered']
    #allocation5 [shape = 's32[1]{0}', space=sflag, size = 0x4, scoped, tag = 'scoped memory for all_text_bert_forward.1']
    %25 = vsyncpa [#allocation3], 0
    %26 = vsyncpa [#allocation5], 0
    // Predicated region
    $region2: #{all_text_bert_forward.1} parent=1 // pred_check
      _
    $region3: #{all_text_bert_forward.1} parent=1 // pred_check_branch
      %28 = sbr.rel (0) target = $region5
    $region4: #{all_text_bert_forward.1} parent=1 // pred_region
      _
    $region5: #{all_text_bert_forward.1} parent=1 // pred_fallthru
      _
    // Predicated region
    $region6: #{all_text_bert_forward.1} parent=1 // pred_check
      _
    $region7: #{all_text_bert_forward.1} parent=1 // pred_check_branch
      %30 = sbr.rel (0) target = $region9
    $region8: #{all_text_bert_forward.1} parent=1 // pred_region
      _
    $region9: #{all_text_bert_forward.1} parent=1 // pred_fallthru
      _
    // Predicated region
    $region10: #{all_text_bert_forward.1} parent=1 // pred_check
      _
    $region11: #{all_text_bert_forward.1} parent=1 // pred_check_branch
      %32 = sbr.rel (0) target = $region13
    $region12: #{all_text_bert_forward.1} parent=1 // pred_region
      _
    $region13: #{all_text_bert_forward.1} parent=1 // pred_fallthru
      _
    // Predicated region
    $region14: #{all_text_bert_forward.1} parent=1 // pred_check
      _
    $region15: #{all_text_bert_forward.1} parent=1 // pred_check_branch
      %34 = sbr.rel (0) target = $region17
    $region16: #{all_text_bert_forward.1} parent=1 // pred_region
      _
    $region17: #{all_text_bert_forward.1} parent=1 // pred_fallthru
      _
    // Predicated region
    $region18: #{all_text_bert_forward.1} parent=1 // pred_check
      _
    $region19: #{all_text_bert_forward.1} parent=1 // pred_check_branch
      %36 = sbr.rel (0) target = $region21
    $region20: #{all_text_bert_forward.1} parent=1 // pred_region
      _
    $region21: #{all_text_bert_forward.1} parent=1 // pred_fallthru
      _
    // Predicated region
    $region22: #{all_text_bert_forward.1} parent=1 // pred_check
      _
    $region23: #{all_text_bert_forward.1} parent=1 // pred_check_branch
      %38 = sbr.rel (0) target = $region25
    $region24: #{all_text_bert_forward.1} parent=1 // pred_region
      _
    $region25: #{all_text_bert_forward.1} parent=1 // pred_fallthru
      _
    // Predicated region
    $region26: #{all_text_bert_forward.1} parent=1 // pred_check
      _
    $region27: #{all_text_bert_forward.1} parent=1 // pred_check_branch
      %40 = sbr.rel (0) target = $region29
    $region28: #{all_text_bert_forward.1} parent=1 // pred_region
      _
    $region29: #{all_text_bert_forward.1} parent=1 // pred_fallthru
      _
    // Predicated region
    $region30: #{all_text_bert_forward.1} parent=1 // pred_check
      _
    $region31: #{all_text_bert_forward.1} parent=1 // pred_check_branch
      %42 = sbr.rel (0) target = $region33
    $region32: #{all_text_bert_forward.1} parent=1 // pred_region
      _
    $region33: #{all_text_bert_forward.1} parent=1 // pred_fallthru
      _
    // Predicated region
    $region34: #{all_text_bert_forward.1} parent=1 // pred_check
      _
    $region35: #{all_text_bert_forward.1} parent=1 // pred_check_branch
      %44 = sbr.rel (0) target = $region37
    $region36: #{all_text_bert_forward.1} parent=1 // pred_region
      _
    $region37: #{all_text_bert_forward.1} parent=1 // pred_fallthru
      _
    // Predicated region
    $region38: #{all_text_bert_forward.1} parent=1 // pred_check
      _
    $region39: #{all_text_bert_forward.1} parent=1 // pred_check_branch
      %46 = sbr.rel (0) target = $region41
    $region40: #{all_text_bert_forward.1} parent=1 // pred_region
      _
    $region41: #{all_text_bert_forward.1} parent=1 // pred_fallthru
      _
    // Predicated region
    $region42: #{all_text_bert_forward.1} parent=1 // pred_check
      _
    $region43: #{all_text_bert_forward.1} parent=1 // pred_check_branch
      %48 = sbr.rel (0) target = $region45
    $region44: #{all_text_bert_forward.1} parent=1 // pred_region
      _
    $region45: #{all_text_bert_forward.1} parent=1 // pred_fallthru
      _
    // Predicated region
    $region46: #{all_text_bert_forward.1} parent=1 // pred_check
      _
    $region47: #{all_text_bert_forward.1} parent=1 // pred_check_branch
      %50 = sbr.rel (0) target = $region49
    $region48: #{all_text_bert_forward.1} parent=1 // pred_region
      _
    $region49: #{all_text_bert_forward.1} parent=1 // pred_fallthru
      _
    // Predicated region
    $region50: #{all_text_bert_forward.1} parent=1 // pred_check
      _
    $region51: #{all_text_bert_forward.1} parent=1 // pred_check_branch
      %52 = sbr.rel (0) target = $region53
    $region52: #{all_text_bert_forward.1} parent=1 // pred_region
      _
    $region53: #{all_text_bert_forward.1} parent=1 // pred_fallthru
      _
    // Predicated region
    $region54: #{all_text_bert_forward.1} parent=1 // pred_check
      _
    $region55: #{all_text_bert_forward.1} parent=1 // pred_check_branch
      %54 = sbr.rel (0) target = $region57
    $region56: #{all_text_bert_forward.1} parent=1 // pred_region
      _
    $region57: #{all_text_bert_forward.1} parent=1 // pred_fallthru
      _
    // Predicated region
    $region58: #{all_text_bert_forward.1} parent=1 // pred_check
      _
    $region59: #{all_text_bert_forward.1} parent=1 // pred_check_branch
      %56 = sbr.rel (0) target = $region61
    $region60: #{all_text_bert_forward.1} parent=1 // pred_region
      _
    $region61: #{all_text_bert_forward.1} parent=1 // pred_fallthru
      _
    // Predicated region
    $region62: #{all_text_bert_forward.1} parent=1 // pred_check
      _
    $region63: #{all_text_bert_forward.1} parent=1 // pred_check_branch
      %58 = sbr.rel (0) target = $region65
    $region64: #{all_text_bert_forward.1} parent=1 // pred_region
      _
    $region65: #{all_text_bert_forward.1} parent=1 // pred_fallthru
      _
    // Predicated region
    $region66: #{all_text_bert_forward.1} parent=1 // pred_check
      _
    $region67: #{all_text_bert_forward.1} parent=1 // pred_check_branch
      %60 = sbr.rel (0) target = $region69
    $region68: #{all_text_bert_forward.1} parent=1 // pred_region
      _
    $region69: #{all_text_bert_forward.1} parent=1 // pred_fallthru
      _
    // Predicated region
    $region70: #{all_text_bert_forward.1} parent=1 // pred_check
      _
    $region71: #{all_text_bert_forward.1} parent=1 // pred_check_branch
      %62 = sbr.rel (0) target = $region73
    $region72: #{all_text_bert_forward.1} parent=1 // pred_region
      _
    $region73: #{all_text_bert_forward.1} parent=1 // pred_fallthru
      _
    %v64 = vld [vmem:[%s0] sm:$0xf]
    %v65 = vld [vmem:[%s0 + $0x4] sm:$0xf]
    %v66 = vunpack.c.l.bf16 %v64
    %v67 = vunpack.c.l.bf16 %v65
    %v68 = vld [vmem:[%s1] sm:$0x1]
    %v69 = vld [vmem:[%s1 + $0x1] sm:$0x1]
    %v70 = vld [vmem:[%s2] sm:$0xf]
    %v71 = vld [vmem:[%s2 + $0x4] sm:$0xf]
    %v72 = vld [vmem:[%s2 + $0x8] sm:$0xf]
    %v73 = vld [vmem:[%s2 + $0xc] sm:$0xf]
    %v74 = vld [vmem:[%s3] sm:$0x1]
    %v76 = vlaneseq
    %v77 = vshrl.u32 %v76, 7
    %v78 = vsub.s32 0, %v77
    %v79 = vrot.slane %v74, %v78
    %v83 = vunpack.c.l.b16 %v64
    %v84 = vunpack.c.l.b16 %v65
    %v85 = vpack.c.b16 %v84, %v83
    %v90 = vunpack.c.l.b16 %v70
    %v91 = vunpack.c.l.b16 %v71
    %v92 = vunpack.c.l.b16 %v72
    %v93 = vunpack.c.l.b16 %v73
    %v94 = vpack.c.b16 %v91, %v90
    %v95 = vpack.c.b16 %v93, %v92
    %vm98 = vcmask 261120
    %v100 = vsel %vm98, %v85, 0
    %102 = vmatprep.subr.bf16.mxu0 0
    %103 = vmatpush1.bf16.msra.mxu0 0
    %104 = vmatprep.subr.bf16.mxu0 0
    %105 = vmatpush1.bf16.msra.mxu0 0
    %106 = vmatprep.subr.bf16.mxu0 0
    %107 = vmatpush1.bf16.msra.mxu0 0
    %108 = vmatprep.subr.bf16.mxu0 0
    %109 = vmatpush1.bf16.msra.mxu0 0
    %110 = vmatprep.subr.bf16.mxu0 0
    %111 = vmatpush1.bf16.msra.mxu0 0
    %112 = vmatprep.subr.bf16.mxu0 0
    %113 = vmatpush1.bf16.msra.mxu0 0
    %114 = vmatprep.subr.bf16.mxu0 0
    %115 = vmatpush1.bf16.msra.mxu0 %v95
    %116 = vmatprep.subr.bf16.mxu0 0
    %117 = vmatpush1.bf16.msra.mxu0 %v94
    %118 = vmatprep.subr.bf16.mxu0 0
    %119 = vmatpush2.bf16.msra.mxu0 0
    %120 = vmatprep.subr.bf16.mxu0 0
    %121 = vmatpush2.bf16.msra.mxu0 0
    %122 = vmatprep.subr.bf16.mxu0 0
    %123 = vmatpush2.bf16.msra.mxu0 0
    %124 = vmatprep.subr.bf16.mxu0 0
    %125 = vmatpush2.bf16.msra.mxu0 0
    %126 = vmatprep.subr.bf16.mxu0 0
    %127 = vmatpush2.bf16.msra.mxu0 0
    %128 = vmatprep.subr.bf16.mxu0 0
    %129 = vmatpush2.bf16.msra.mxu0 0
    %130 = vmatprep.subr.bf16.mxu0 0
    %131 = vmatpush2.bf16.msra.mxu0 0
    %132 = vmatprep.subr.bf16.mxu0 0
    %133 = vmatpush2.bf16.msra.mxu0 0
    %134 = vmatprep.mubr.bf16.mxu0 0
    %135 = vmatmul.mubr.bf16.gmra.mxu0 %v100
    %v136 = vpop.f32.mrf.mxu0
    %v137 = vadd.f32 %v79, %v136
    %v138 = vpop.f32.mrf.mxu0
    %v139 = vpop.f32.mrf.mxu0
    %v140 = vadd.f32 %v79, %v139
    %v141 = vpop.f32.mrf.mxu0
    %142 = vdwg.mxu0
    %v143 = vmul.f32 %v137, 0.17677669
    %v144 = vmul.f32 %v140, 0.17677669
    %v145 = vpack.c.bf16 %v143, %v143
    %v146 = vpack.c.bf16 %v144, %v144
    %v147 = vpack.c.bf16 %v137, %v137
    %v148 = vpack.c.bf16 %v140, %v140
    %v151 = vlaneseq
    %v152 = vshrl.u32 %v151, 7
    %v153 = vsub.s32 0, %v152
    %v154 = vrot.slane %v68, %v153
    %v155 = vlaneseq
    %v156 = vshrl.u32 %v155, 7
    %v157 = vsub.s32 0, %v156
    %v158 = vrot.slane %v69, %v157
    %162 = vrot.lane.b32.xlu0 %v147, 96
    %v163 = vpop.permute.xlu0 %162
    %v165 = vsel %vm98, %v145, 0
    %v168 = vsel %vm98, %v163, 0
    %170 = vmatprep.subr.bf16.mxu0 0
    %171 = vmatpush1.bf16.xpose.msra.mxu0 0
    %172 = vmatprep.subr.bf16.mxu0 0
    %173 = vmatpush1.bf16.xpose.msra.mxu0 0
    %174 = vmatprep.subr.bf16.mxu0 0
    %175 = vmatpush1.bf16.xpose.msra.mxu0 0
    %176 = vmatprep.subr.bf16.mxu0 0
    %177 = vmatpush1.bf16.xpose.msra.mxu0 0
    %178 = vmatprep.subr.bf16.mxu0 0
    %179 = vmatpush1.bf16.xpose.msra.mxu0 0
    %180 = vmatprep.subr.bf16.mxu0 0
    %181 = vmatpush1.bf16.xpose.msra.mxu0 0
    %182 = vmatprep.subr.bf16.mxu0 0
    %183 = vmatpush1.bf16.xpose.msra.mxu0 0
    %184 = vmatprep.subr.bf16.mxu0 0
    %185 = vmatpush1.bf16.xpose.msra.mxu0 %v168
    %186 = vmatprep.subr.bf16.mxu0 0
    %187 = vmatpush2.bf16.xpose.msra.mxu0 0
    %188 = vmatprep.subr.bf16.mxu0 0
    %189 = vmatpush2.bf16.xpose.msra.mxu0 0
    %190 = vmatprep.subr.bf16.mxu0 0
    %191 = vmatpush2.bf16.xpose.msra.mxu0 0
    %192 = vmatprep.subr.bf16.mxu0 0
    %193 = vmatpush2.bf16.xpose.msra.mxu0 0
    %194 = vmatprep.subr.bf16.mxu0 0
    %195 = vmatpush2.bf16.xpose.msra.mxu0 0
    %196 = vmatprep.subr.bf16.mxu0 0
    %197 = vmatpush2.bf16.xpose.msra.mxu0 0
    %198 = vmatprep.subr.bf16.mxu0 0
    %199 = vmatpush2.bf16.xpose.msra.mxu0 0
    %200 = vmatprep.subr.bf16.mxu0 0
    %201 = vmatpush2.bf16.xpose.msra.mxu0 0
    %202 = vmatprep.mubr.bf16.mxu0 0
    %203 = vmatmul.mubr.bf16.gmra.mxu0 %v165
    %v204 = vpop.f32.mrf.mxu0
    %v205 = vadd.f32 %v154, %v204
    %v206 = vpop.f32.mrf.mxu0
    %v207 = vpop.f32.mrf.mxu0
    %v208 = vpop.f32.mrf.mxu0
    %209 = vdwg.mxu0
    %211 = vrot.lane.b32.xlu0 %v148, 96
    %v212 = vpop.permute.xlu0 %211
    %v214 = vsel %vm98, %v146, 0
    %v217 = vsel %vm98, %v212, 0
    %219 = vmatprep.subr.bf16.mxu0 0
    %220 = vmatpush1.bf16.xpose.msra.mxu0 0
    %221 = vmatprep.subr.bf16.mxu0 0
    %222 = vmatpush1.bf16.xpose.msra.mxu0 0
    %223 = vmatprep.subr.bf16.mxu0 0
    %224 = vmatpush1.bf16.xpose.msra.mxu0 0
    %225 = vmatprep.subr.bf16.mxu0 0
    %226 = vmatpush1.bf16.xpose.msra.mxu0 0
    %227 = vmatprep.subr.bf16.mxu0 0
    %228 = vmatpush1.bf16.xpose.msra.mxu0 0
    %229 = vmatprep.subr.bf16.mxu0 0
    %230 = vmatpush1.bf16.xpose.msra.mxu0 0
    %231 = vmatprep.subr.bf16.mxu0 0
    %232 = vmatpush1.bf16.xpose.msra.mxu0 0
    %233 = vmatprep.subr.bf16.mxu0 0
    %234 = vmatpush1.bf16.xpose.msra.mxu0 %v217
    %235 = vmatprep.subr.bf16.mxu0 0
    %236 = vmatpush2.bf16.xpose.msra.mxu0 0
    %237 = vmatprep.subr.bf16.mxu0 0
    %238 = vmatpush2.bf16.xpose.msra.mxu0 0
    %239 = vmatprep.subr.bf16.mxu0 0
    %240 = vmatpush2.bf16.xpose.msra.mxu0 0
    %241 = vmatprep.subr.bf16.mxu0 0
    %242 = vmatpush2.bf16.xpose.msra.mxu0 0
    %243 = vmatprep.subr.bf16.mxu0 0
    %244 = vmatpush2.bf16.xpose.msra.mxu0 0
    %245 = vmatprep.subr.bf16.mxu0 0
    %246 = vmatpush2.bf16.xpose.msra.mxu0 0
    %247 = vmatprep.subr.bf16.mxu0 0
    %248 = vmatpush2.bf16.xpose.msra.mxu0 0
    %249 = vmatprep.subr.bf16.mxu0 0
    %250 = vmatpush2.bf16.xpose.msra.mxu0 0
    %251 = vmatprep.mubr.bf16.mxu0 0
    %252 = vmatmul.mubr.bf16.gmra.mxu0 %v214
    %v253 = vpop.f32.mrf.mxu0
    %v254 = vadd.f32 %v158, %v253
    %v255 = vpop.f32.mrf.mxu0
    %v256 = vpop.f32.mrf.mxu0
    %v257 = vpop.f32.mrf.mxu0
    %258 = vdwg.mxu0
    %vm259 = vcmask 64512
    %v260 = vsel %vm259, %v205, -inf
    %261 = vmax.xlane.f32.xlu0 %v260
    %v262 = vpop.xlane.xlu0 %261
    %v263 = vsel %vm259, %v254, -inf
    %264 = vmax.xlane.f32.xlu0 %v263
    %v265 = vpop.xlane.xlu0 %264
    %v266 = vsub.f32 %v205, %v262
    %v267 = vsub.f32 %v254, %v265
    %v268 = vmul.f32 %v266, 1.442695
    %v269 = vpow.pop %v268
    %v270 = vmul.f32 %v267, 1.442695
    %v271 = vpow.pop %v270
    %v272 = vsel %vm259, %v269, 0.0
    %273 = vadd.xlane.f32.xlu0 %v272
    %v274 = vpop.xlane.xlu0 %273
    %v275 = vsel %vm259, %v271, 0.0
    %276 = vadd.xlane.f32.xlu0 %v275
    %v277 = vpop.xlane.xlu0 %276
    %v278 = vrcp.pop %v274
    %v279 = vrcp.pop %v277
    %v280 = vmul.f32 %v269, %v278
    %v281 = vmul.f32 %v271, %v279
    %v282 = vpack.c.bf16 %v280, %v280
    %v283 = vpack.c.bf16 %v281, %v281
    %284 = vrot.lane.b32.xlu0 %v147, 64
    %v285 = vpop.permute.xlu0 %284
    %v287 = vsel %vm259, %v282, 0
    %vm289 = vcmask 1043456
    %v291 = vsel %vm289, %v285, 0
    %293 = vmatprep.subr.bf16.mxu0 0
    %294 = vmatpush1.bf16.msra.mxu0 0
    %295 = vmatprep.subr.bf16.mxu0 0
    %296 = vmatpush1.bf16.msra.mxu0 0
    %297 = vmatprep.subr.bf16.mxu0 0
    %298 = vmatpush1.bf16.msra.mxu0 0
    %299 = vmatprep.subr.bf16.mxu0 0
    %300 = vmatpush1.bf16.msra.mxu0 0
    %301 = vmatprep.subr.bf16.mxu0 0
    %302 = vmatpush1.bf16.msra.mxu0 0
    %303 = vmatprep.subr.bf16.mxu0 0
    %304 = vmatpush1.bf16.msra.mxu0 0
    %305 = vmatprep.subr.bf16.mxu0 0
    %306 = vmatpush1.bf16.msra.mxu0 0
    %307 = vmatprep.subr.bf16.mxu0 0
    %308 = vmatpush1.bf16.msra.mxu0 %v291
    %309 = vmatprep.subr.bf16.mxu0 0
    %310 = vmatpush2.bf16.msra.mxu0 0
    %311 = vmatprep.subr.bf16.mxu0 0
    %312 = vmatpush2.bf16.msra.mxu0 0
    %313 = vmatprep.subr.bf16.mxu0 0
    %314 = vmatpush2.bf16.msra.mxu0 0
    %315 = vmatprep.subr.bf16.mxu0 0
    %316 = vmatpush2.bf16.msra.mxu0 0
    %317 = vmatprep.subr.bf16.mxu0 0
    %318 = vmatpush2.bf16.msra.mxu0 0
    %319 = vmatprep.subr.bf16.mxu0 0
    %320 = vmatpush2.bf16.msra.mxu0 0
    %321 = vmatprep.subr.bf16.mxu0 0
    %322 = vmatpush2.bf16.msra.mxu0 0
    %323 = vmatprep.subr.bf16.mxu0 0
    %324 = vmatpush2.bf16.msra.mxu0 0
    %325 = vmatprep.mubr.bf16.mxu0 0
    %326 = vmatmul.mubr.bf16.gmra.mxu0 %v287
    %v327 = vpop.f32.mrf.mxu0
    %v328 = vadd.f32 0.0, %v327
    %v329 = vpop.f32.mrf.mxu0
    %v330 = vpop.f32.mrf.mxu0
    %v331 = vpop.f32.mrf.mxu0
    %332 = vdwg.mxu0
    %333 = vrot.lane.b32.xlu0 %v148, 64
    %v334 = vpop.permute.xlu0 %333
    %v336 = vsel %vm259, %v283, 0
    %v339 = vsel %vm289, %v334, 0
    %341 = vmatprep.subr.bf16.mxu0 0
    %342 = vmatpush1.bf16.msra.mxu0 0
    %343 = vmatprep.subr.bf16.mxu0 0
    %344 = vmatpush1.bf16.msra.mxu0 0
    %345 = vmatprep.subr.bf16.mxu0 0
    %346 = vmatpush1.bf16.msra.mxu0 0
    %347 = vmatprep.subr.bf16.mxu0 0
    %348 = vmatpush1.bf16.msra.mxu0 0
    %349 = vmatprep.subr.bf16.mxu0 0
    %350 = vmatpush1.bf16.msra.mxu0 0
    %351 = vmatprep.subr.bf16.mxu0 0
    %352 = vmatpush1.bf16.msra.mxu0 0
    %353 = vmatprep.subr.bf16.mxu0 0
    %354 = vmatpush1.bf16.msra.mxu0 0
    %355 = vmatprep.subr.bf16.mxu0 0
    %356 = vmatpush1.bf16.msra.mxu0 %v339
    %357 = vmatprep.subr.bf16.mxu0 0
    %358 = vmatpush2.bf16.msra.mxu0 0
    %359 = vmatprep.subr.bf16.mxu0 0
    %360 = vmatpush2.bf16.msra.mxu0 0
    %361 = vmatprep.subr.bf16.mxu0 0
    %362 = vmatpush2.bf16.msra.mxu0 0
    %363 = vmatprep.subr.bf16.mxu0 0
    %364 = vmatpush2.bf16.msra.mxu0 0
    %365 = vmatprep.subr.bf16.mxu0 0
    %366 = vmatpush2.bf16.msra.mxu0 0
    %367 = vmatprep.subr.bf16.mxu0 0
    %368 = vmatpush2.bf16.msra.mxu0 0
    %369 = vmatprep.subr.bf16.mxu0 0
    %370 = vmatpush2.bf16.msra.mxu0 0
    %371 = vmatprep.subr.bf16.mxu0 0
    %372 = vmatpush2.bf16.msra.mxu0 0
    %373 = vmatprep.mubr.bf16.mxu0 0
    %374 = vmatmul.mubr.bf16.gmra.mxu0 %v336
    %v375 = vpop.f32.mrf.mxu0
    %v376 = vadd.f32 0.0, %v375
    %v377 = vpop.f32.mrf.mxu0
    %v378 = vpop.f32.mrf.mxu0
    %v379 = vpop.f32.mrf.mxu0
    %380 = vdwg.mxu0
    %v381 = vpack.c.bf16 %v376, %v328
    %v382 = vld [vmem:[%s4] sm:$0xf]
    %v383 = vld [vmem:[%s4 + $0x4] sm:$0xf]
    %v384 = vld [vmem:[%s4 + $0x8] sm:$0xf]
    %v385 = vld [vmem:[%s4 + $0xc] sm:$0xf]
    %v386 = vld [vmem:[%s5] sm:$0x1]
    %v388 = vlaneseq
    %v389 = vshrl.u32 %v388, 7
    %v390 = vsub.s32 0, %v389
    %v391 = vrot.slane %v386, %v390
    %v397 = vunpack.c.l.b16 %v382
    %v398 = vunpack.c.l.b16 %v383
    %v399 = vunpack.c.l.b16 %v384
    %v400 = vunpack.c.l.b16 %v385
    %v401 = vpack.c.b16 %v398, %v397
    %v402 = vpack.c.b16 %v400, %v399
    %v406 = vsel %vm98, %v381, 0
    %408 = vmatprep.subr.bf16.mxu0 0
    %409 = vmatpush1.bf16.msra.mxu0 0
    %410 = vmatprep.subr.bf16.mxu0 0
    %411 = vmatpush1.bf16.msra.mxu0 0
    %412 = vmatprep.subr.bf16.mxu0 0
    %413 = vmatpush1.bf16.msra.mxu0 0
    %414 = vmatprep.subr.bf16.mxu0 0
    %415 = vmatpush1.bf16.msra.mxu0 0
    %416 = vmatprep.subr.bf16.mxu0 0
    %417 = vmatpush1.bf16.msra.mxu0 0
    %418 = vmatprep.subr.bf16.mxu0 0
    %419 = vmatpush1.bf16.msra.mxu0 0
    %420 = vmatprep.subr.bf16.mxu0 0
    %421 = vmatpush1.bf16.msra.mxu0 %v402
    %422 = vmatprep.subr.bf16.mxu0 0
    %423 = vmatpush1.bf16.msra.mxu0 %v401
    %424 = vmatprep.subr.bf16.mxu0 0
    %425 = vmatpush2.bf16.msra.mxu0 0
    %426 = vmatprep.subr.bf16.mxu0 0
    %427 = vmatpush2.bf16.msra.mxu0 0
    %428 = vmatprep.subr.bf16.mxu0 0
    %429 = vmatpush2.bf16.msra.mxu0 0
    %430 = vmatprep.subr.bf16.mxu0 0
    %431 = vmatpush2.bf16.msra.mxu0 0
    %432 = vmatprep.subr.bf16.mxu0 0
    %433 = vmatpush2.bf16.msra.mxu0 0
    %434 = vmatprep.subr.bf16.mxu0 0
    %435 = vmatpush2.bf16.msra.mxu0 0
    %436 = vmatprep.subr.bf16.mxu0 0
    %437 = vmatpush2.bf16.msra.mxu0 0
    %438 = vmatprep.subr.bf16.mxu0 0
    %439 = vmatpush2.bf16.msra.mxu0 0
    %440 = vmatprep.mubr.bf16.mxu0 0
    %441 = vmatmul.mubr.bf16.gmra.mxu0 %v406
    %v442 = vpop.f32.mrf.mxu0
    %v443 = vadd.f32 %v391, %v442
    %v444 = vpop.f32.mrf.mxu0
    %v445 = vpop.f32.mrf.mxu0
    %v446 = vadd.f32 %v391, %v445
    %v447 = vpop.f32.mrf.mxu0
    %448 = vdwg.mxu0
    %v449 = vadd.f32 %v66, %v443
    %v450 = vadd.f32 %v67, %v446
    %v451 = vsel %vm98, %v449, 0.0
    %452 = vadd.xlane.f32.xlu0 %v451
    %v453 = vpop.xlane.xlu0 %452
    %v454 = vsel %vm98, %v450, 0.0
    %455 = vadd.xlane.f32.xlu0 %v454
    %v456 = vpop.xlane.xlu0 %455
    %v457 = vrcp.pop 32.0
    %v458 = vmul.f32 %v453, %v457
    %v459 = vmul.f32 %v456, %v457
    %v460 = vmul.f32 %v449, %v449
    %v461 = vmul.f32 %v450, %v450
    %v462 = vsel %vm98, %v460, 0.0
    %463 = vadd.xlane.f32.xlu0 %v462
    %v464 = vpop.xlane.xlu0 %463
    %v465 = vsel %vm98, %v461, 0.0
    %466 = vadd.xlane.f32.xlu0 %v465
    %v467 = vpop.xlane.xlu0 %466
    %v468 = vmul.f32 %v464, %v457
    %v469 = vmul.f32 %v467, %v457
    %v470 = vmul.f32 %v458, %v458
    %v471 = vmul.f32 %v459, %v459
    %v472 = vsub.f32 %v468, %v470
    %v473 = vsub.f32 %v469, %v471
    %v474 = vsub.f32 %v449, %v458
    %v475 = vsub.f32 %v450, %v459
    %v476 = vadd.f32 %v472, 1e-12
    %v477 = vadd.f32 %v473, 1e-12
    %v478 = vrsqrt.pop %v476
    %v479 = vrsqrt.pop %v477
    %v480 = vmul.f32 %v474, %v478
    %v481 = vmul.f32 %v475, %v479
    %v482 = vld [vmem:[%s6] sm:$0x1]
    %v484 = vlaneseq
    %v485 = vshrl.u32 %v484, 7
    %v486 = vsub.s32 0, %v485
    %v487 = vrot.slane %v482, %v486
    %v489 = vmul.f32 %v480, %v487
    %v490 = vmul.f32 %v481, %v487
    %v491 = vld [vmem:[%s7] sm:$0x1]
    %v493 = vlaneseq
    %v494 = vshrl.u32 %v493, 7
    %v495 = vsub.s32 0, %v494
    %v496 = vrot.slane %v491, %v495
    %v498 = vadd.f32 %v489, %v496
    %v499 = vadd.f32 %v490, %v496
    %v500 = vpack.c.bf16 %v499, %v498
    %v501 = vld [vmem:[%s8] sm:$0xf]
    %v502 = vld [vmem:[%s8 + $0x4] sm:$0xf]
    %v503 = vld [vmem:[%s8 + $0x8] sm:$0xf]
    %v504 = vld [vmem:[%s8 + $0xc] sm:$0xf]
    %v505 = vld [vmem:[%s9] sm:$0x1]
    %v507 = vlaneseq
    %v508 = vshrl.u32 %v507, 7
    %v509 = vsub.s32 0, %v508
    %v510 = vrot.slane %v505, %v509
    %v516 = vunpack.c.l.b16 %v501
    %v517 = vunpack.c.l.b16 %v502
    %v518 = vunpack.c.l.b16 %v503
    %v519 = vunpack.c.l.b16 %v504
    %v520 = vpack.c.b16 %v517, %v516
    %v521 = vpack.c.b16 %v519, %v518
    %v525 = vsel %vm98, %v500, 0
    %527 = vmatprep.subr.bf16.mxu0 0
    %528 = vmatpush1.bf16.msra.mxu0 0
    %529 = vmatprep.subr.bf16.mxu0 0
    %530 = vmatpush1.bf16.msra.mxu0 0
    %531 = vmatprep.subr.bf16.mxu0 0
    %532 = vmatpush1.bf16.msra.mxu0 0
    %533 = vmatprep.subr.bf16.mxu0 0
    %534 = vmatpush1.bf16.msra.mxu0 0
    %535 = vmatprep.subr.bf16.mxu0 0
    %536 = vmatpush1.bf16.msra.mxu0 0
    %537 = vmatprep.subr.bf16.mxu0 0
    %538 = vmatpush1.bf16.msra.mxu0 0
    %539 = vmatprep.subr.bf16.mxu0 0
    %540 = vmatpush1.bf16.msra.mxu0 %v521
    %541 = vmatprep.subr.bf16.mxu0 0
    %542 = vmatpush1.bf16.msra.mxu0 %v520
    %543 = vmatprep.subr.bf16.mxu0 0
    %544 = vmatpush2.bf16.msra.mxu0 0
    %545 = vmatprep.subr.bf16.mxu0 0
    %546 = vmatpush2.bf16.msra.mxu0 0
    %547 = vmatprep.subr.bf16.mxu0 0
    %548 = vmatpush2.bf16.msra.mxu0 0
    %549 = vmatprep.subr.bf16.mxu0 0
    %550 = vmatpush2.bf16.msra.mxu0 0
    %551 = vmatprep.subr.bf16.mxu0 0
    %552 = vmatpush2.bf16.msra.mxu0 0
    %553 = vmatprep.subr.bf16.mxu0 0
    %554 = vmatpush2.bf16.msra.mxu0 0
    %555 = vmatprep.subr.bf16.mxu0 0
    %556 = vmatpush2.bf16.msra.mxu0 0
    %557 = vmatprep.subr.bf16.mxu0 0
    %558 = vmatpush2.bf16.msra.mxu0 0
    %559 = vmatprep.mubr.bf16.mxu0 0
    %560 = vmatmul.mubr.bf16.gmra.mxu0 %v525
    %v561 = vpop.f32.mrf.mxu0
    %v562 = vadd.f32 %v510, %v561
    %v563 = vpop.f32.mrf.mxu0
    %v564 = vpop.f32.mrf.mxu0
    %v565 = vadd.f32 %v510, %v564
    %v566 = vpop.f32.mrf.mxu0
    %567 = vdwg.mxu0
    %v568 = vmax.f32 %v562, 0.0
    %v569 = vmax.f32 %v565, 0.0
    %v570 = vpack.c.bf16 %v569, %v568
    %v571 = vld [vmem:[%s10] sm:$0xf]
    %v572 = vld [vmem:[%s10 + $0x4] sm:$0xf]
    %v573 = vld [vmem:[%s10 + $0x8] sm:$0xf]
    %v574 = vld [vmem:[%s10 + $0xc] sm:$0xf]
    %v575 = vld [vmem:[%s10 + $0x10] sm:$0xf]
    %v576 = vld [vmem:[%s10 + $0x14] sm:$0xf]
    %v577 = vld [vmem:[%s10 + $0x18] sm:$0xf]
    %v578 = vld [vmem:[%s10 + $0x1c] sm:$0xf]
    %v579 = vld [vmem:[%s11] sm:$0x1]
    %v581 = vlaneseq
    %v582 = vshrl.u32 %v581, 7
    %v583 = vsub.s32 0, %v582
    %v584 = vrot.slane %v579, %v583
    %v594 = vunpack.c.l.b16 %v571
    %v595 = vunpack.c.l.b16 %v572
    %v596 = vunpack.c.l.b16 %v573
    %v597 = vunpack.c.l.b16 %v574
    %v598 = vunpack.c.l.b16 %v575
    %v599 = vunpack.c.l.b16 %v576
    %v600 = vunpack.c.l.b16 %v577
    %v601 = vunpack.c.l.b16 %v578
    %v602 = vpack.c.b16 %v595, %v594
    %v603 = vpack.c.b16 %v597, %v596
    %v604 = vpack.c.b16 %v599, %v598
    %v605 = vpack.c.b16 %v601, %v600
    %vm610 = vcmask 523264
    %v612 = vsel %vm610, %v570, 0
    %614 = vmatprep.subr.bf16.mxu0 0
    %615 = vmatpush1.bf16.msra.mxu0 0
    %616 = vmatprep.subr.bf16.mxu0 0
    %617 = vmatpush1.bf16.msra.mxu0 0
    %618 = vmatprep.subr.bf16.mxu0 0
    %619 = vmatpush1.bf16.msra.mxu0 0
    %620 = vmatprep.subr.bf16.mxu0 0
    %621 = vmatpush1.bf16.msra.mxu0 0
    %622 = vmatprep.subr.bf16.mxu0 0
    %623 = vmatpush1.bf16.msra.mxu0 %v605
    %624 = vmatprep.subr.bf16.mxu0 0
    %625 = vmatpush1.bf16.msra.mxu0 %v604
    %626 = vmatprep.subr.bf16.mxu0 0
    %627 = vmatpush1.bf16.msra.mxu0 %v603
    %628 = vmatprep.subr.bf16.mxu0 0
    %629 = vmatpush1.bf16.msra.mxu0 %v602
    %630 = vmatprep.subr.bf16.mxu0 0
    %631 = vmatpush2.bf16.msra.mxu0 0
    %632 = vmatprep.subr.bf16.mxu0 0
    %633 = vmatpush2.bf16.msra.mxu0 0
    %634 = vmatprep.subr.bf16.mxu0 0
    %635 = vmatpush2.bf16.msra.mxu0 0
    %636 = vmatprep.subr.bf16.mxu0 0
    %637 = vmatpush2.bf16.msra.mxu0 0
    %638 = vmatprep.subr.bf16.mxu0 0
    %639 = vmatpush2.bf16.msra.mxu0 0
    %640 = vmatprep.subr.bf16.mxu0 0
    %641 = vmatpush2.bf16.msra.mxu0 0
    %642 = vmatprep.subr.bf16.mxu0 0
    %643 = vmatpush2.bf16.msra.mxu0 0
    %644 = vmatprep.subr.bf16.mxu0 0
    %645 = vmatpush2.bf16.msra.mxu0 0
    %646 = vmatprep.mubr.bf16.mxu0 0
    %647 = vmatmul.mubr.bf16.gmra.mxu0 %v612
    %v648 = vpop.f32.mrf.mxu0
    %v649 = vadd.f32 %v584, %v648
    %v650 = vpop.f32.mrf.mxu0
    %v651 = vpop.f32.mrf.mxu0
    %v652 = vadd.f32 %v584, %v651
    %v653 = vpop.f32.mrf.mxu0
    %654 = vdwg.mxu0
    %v655 = vadd.f32 %v498, %v649
    %v656 = vadd.f32 %v499, %v652
    %v657 = vsel %vm98, %v655, 0.0
    %658 = vadd.xlane.f32.xlu0 %v657
    %v659 = vpop.xlane.xlu0 %658
    %v660 = vsel %vm98, %v656, 0.0
    %661 = vadd.xlane.f32.xlu0 %v660
    %v662 = vpop.xlane.xlu0 %661
    %v663 = vmul.f32 %v659, %v457
    %v664 = vmul.f32 %v662, %v457
    %v665 = vmul.f32 %v655, %v655
    %v666 = vmul.f32 %v656, %v656
    %v667 = vsel %vm98, %v665, 0.0
    %668 = vadd.xlane.f32.xlu0 %v667
    %v669 = vpop.xlane.xlu0 %668
    %v670 = vsel %vm98, %v666, 0.0
    %671 = vadd.xlane.f32.xlu0 %v670
    %v672 = vpop.xlane.xlu0 %671
    %v673 = vmul.f32 %v669, %v457
    %v674 = vmul.f32 %v672, %v457
    %v675 = vmul.f32 %v663, %v663
    %v676 = vmul.f32 %v664, %v664
    %v677 = vsub.f32 %v673, %v675
    %v678 = vsub.f32 %v674, %v676
    %v679 = vsub.f32 %v655, %v663
    %v680 = vsub.f32 %v656, %v664
    %v681 = vadd.f32 %v677, 1e-12
    %v682 = vadd.f32 %v678, 1e-12
    %v683 = vrsqrt.pop %v681
    %v684 = vrsqrt.pop %v682
    %v685 = vmul.f32 %v679, %v683
    %v686 = vmul.f32 %v680, %v684
    %v687 = vld [vmem:[%s12] sm:$0x1]
    %v689 = vlaneseq
    %v690 = vshrl.u32 %v689, 7
    %v691 = vsub.s32 0, %v690
    %v692 = vrot.slane %v687, %v691
    %v694 = vmul.f32 %v685, %v692
    %v695 = vmul.f32 %v686, %v692
    %v696 = vld [vmem:[%s13] sm:$0x1]
    %v698 = vlaneseq
    %v699 = vshrl.u32 %v698, 7
    %v700 = vsub.s32 0, %v699
    %v701 = vrot.slane %v696, %v700
    %v703 = vadd.f32 %v694, %v701
    %v704 = vadd.f32 %v695, %v701
    %v705 = vpack.c.bf16 %v703, %v703
    %v706 = vpack.c.bf16 %v704, %v704
    %v707 = vld [vmem:[%s14] sm:$0xf]
    %v708 = vld [vmem:[%s14 + $0x4] sm:$0xf]
    %v709 = vld [vmem:[%s14 + $0x8] sm:$0xf]
    %v710 = vld [vmem:[%s14 + $0xc] sm:$0xf]
    %v711 = vld [vmem:[%s15] sm:$0x1]
    %v713 = vlaneseq
    %v714 = vshrl.u32 %v713, 7
    %v715 = vsub.s32 0, %v714
    %v716 = vrot.slane %v711, %v715
    %v720 = vunpack.c.l.b16 %v705
    %v721 = vunpack.c.l.b16 %v706
    %v722 = vrot.slane %v721, 7
    %vm723 = vcmask 1041409
    %v724 = vsel %vm723, %v722, %v720
    %v725 = vpack.c.b16 %v724, %v724
    %v730 = vunpack.c.l.b16 %v707
    %v731 = vunpack.c.l.b16 %v708
    %v732 = vunpack.c.l.b16 %v709
    %v733 = vunpack.c.l.b16 %v710
    %v734 = vpack.c.b16 %v731, %v730
    %v735 = vpack.c.b16 %v733, %v732
    %v739 = vsel %vm98, %v725, 0
    %741 = vmatprep.subr.bf16.mxu0 0
    %742 = vmatpush1.bf16.msra.mxu0 0
    %743 = vmatprep.subr.bf16.mxu0 0
    %744 = vmatpush1.bf16.msra.mxu0 0
    %745 = vmatprep.subr.bf16.mxu0 0
    %746 = vmatpush1.bf16.msra.mxu0 0
    %747 = vmatprep.subr.bf16.mxu0 0
    %748 = vmatpush1.bf16.msra.mxu0 0
    %749 = vmatprep.subr.bf16.mxu0 0
    %750 = vmatpush1.bf16.msra.mxu0 0
    %751 = vmatprep.subr.bf16.mxu0 0
    %752 = vmatpush1.bf16.msra.mxu0 0
    %753 = vmatprep.subr.bf16.mxu0 0
    %754 = vmatpush1.bf16.msra.mxu0 %v735
    %755 = vmatprep.subr.bf16.mxu0 0
    %756 = vmatpush1.bf16.msra.mxu0 %v734
    %757 = vmatprep.subr.bf16.mxu0 0
    %758 = vmatpush2.bf16.msra.mxu0 0
    %759 = vmatprep.subr.bf16.mxu0 0
    %760 = vmatpush2.bf16.msra.mxu0 0
    %761 = vmatprep.subr.bf16.mxu0 0
    %762 = vmatpush2.bf16.msra.mxu0 0
    %763 = vmatprep.subr.bf16.mxu0 0
    %764 = vmatpush2.bf16.msra.mxu0 0
    %765 = vmatprep.subr.bf16.mxu0 0
    %766 = vmatpush2.bf16.msra.mxu0 0
    %767 = vmatprep.subr.bf16.mxu0 0
    %768 = vmatpush2.bf16.msra.mxu0 0
    %769 = vmatprep.subr.bf16.mxu0 0
    %770 = vmatpush2.bf16.msra.mxu0 0
    %771 = vmatprep.subr.bf16.mxu0 0
    %772 = vmatpush2.bf16.msra.mxu0 0
    %773 = vmatprep.mubr.bf16.mxu0 0
    %774 = vmatmul.mubr.bf16.gmra.mxu0 %v739
    %v775 = vpop.f32.mrf.mxu0
    %v776 = vadd.f32 %v716, %v775
    %v777 = vpop.f32.mrf.mxu0
    %v778 = vpop.f32.mrf.mxu0
    %v779 = vpop.f32.mrf.mxu0
    %780 = vdwg.mxu0
    %v781 = vmax.f32 %v776, 0.0
    %v782 = vpack.c.bf16 %v781, %v781
    %v783 = vld [vmem:[%s16] sm:$0xf]
    %v784 = vld [vmem:[%s16 + $0x4] sm:$0xf]
    %v785 = vld [vmem:[%s16 + $0x8] sm:$0xf]
    %v786 = vld [vmem:[%s16 + $0xc] sm:$0xf]
    %v787 = vld [vmem:[%s16 + $0x10] sm:$0xf]
    %v788 = vld [vmem:[%s16 + $0x14] sm:$0xf]
    %v789 = vld [vmem:[%s16 + $0x18] sm:$0xf]
    %v790 = vld [vmem:[%s16 + $0x1c] sm:$0xf]
    %v791 = vld [vmem:[%s17] sm:$0x1]
    %v793 = vlaneseq
    %v794 = vshrl.u32 %v793, 7
    %v795 = vsub.s32 0, %v794
    %v796 = vrot.slane %v791, %v795
    %v806 = vunpack.c.l.b16 %v783
    %v807 = vunpack.c.l.b16 %v784
    %v808 = vunpack.c.l.b16 %v785
    %v809 = vunpack.c.l.b16 %v786
    %v810 = vunpack.c.l.b16 %v787
    %v811 = vunpack.c.l.b16 %v788
    %v812 = vunpack.c.l.b16 %v789
    %v813 = vunpack.c.l.b16 %v790
    %v814 = vpack.c.b16 %v807, %v806
    %v815 = vpack.c.b16 %v809, %v808
    %v816 = vpack.c.b16 %v811, %v810
    %v817 = vpack.c.b16 %v813, %v812
    %v823 = vsel %vm610, %v782, 0
    %825 = vmatprep.subr.bf16.mxu0 0
    %826 = vmatpush1.bf16.msra.mxu0 0
    %827 = vmatprep.subr.bf16.mxu0 0
    %828 = vmatpush1.bf16.msra.mxu0 0
    %829 = vmatprep.subr.bf16.mxu0 0
    %830 = vmatpush1.bf16.msra.mxu0 0
    %831 = vmatprep.subr.bf16.mxu0 0
    %832 = vmatpush1.bf16.msra.mxu0 0
    %833 = vmatprep.subr.bf16.mxu0 0
    %834 = vmatpush1.bf16.msra.mxu0 %v817
    %835 = vmatprep.subr.bf16.mxu0 0
    %836 = vmatpush1.bf16.msra.mxu0 %v816
    %837 = vmatprep.subr.bf16.mxu0 0
    %838 = vmatpush1.bf16.msra.mxu0 %v815
    %839 = vmatprep.subr.bf16.mxu0 0
    %840 = vmatpush1.bf16.msra.mxu0 %v814
    %841 = vmatprep.subr.bf16.mxu0 0
    %842 = vmatpush2.bf16.msra.mxu0 0
    %843 = vmatprep.subr.bf16.mxu0 0
    %844 = vmatpush2.bf16.msra.mxu0 0
    %845 = vmatprep.subr.bf16.mxu0 0
    %846 = vmatpush2.bf16.msra.mxu0 0
    %847 = vmatprep.subr.bf16.mxu0 0
    %848 = vmatpush2.bf16.msra.mxu0 0
    %849 = vmatprep.subr.bf16.mxu0 0
    %850 = vmatpush2.bf16.msra.mxu0 0
    %851 = vmatprep.subr.bf16.mxu0 0
    %852 = vmatpush2.bf16.msra.mxu0 0
    %853 = vmatprep.subr.bf16.mxu0 0
    %854 = vmatpush2.bf16.msra.mxu0 0
    %855 = vmatprep.subr.bf16.mxu0 0
    %856 = vmatpush2.bf16.msra.mxu0 0
    %857 = vmatprep.mubr.bf16.mxu0 0
    %858 = vmatmul.mubr.bf16.gmra.mxu0 %v823
    %v859 = vpop.f32.mrf.mxu0
    %v860 = vadd.f32 %v796, %v859
    %v861 = vpop.f32.mrf.mxu0
    %v862 = vpop.f32.mrf.mxu0
    %v863 = vpop.f32.mrf.mxu0
    %864 = vdwg.mxu0
    %v867 = vrot.slane %v704, 7
    %v868 = vsel %vm723, %v867, %v703
    %v870 = vsel %vm98, %v868, 0.0
    %871 = vst [vmem:[#allocation2] sm:$0x3] %v870
    %872 = vst [vmem:[#allocation4] sm:$0x3] %v860
    // Predicated region
    $region74: #{all_text_bert_forward.1} parent=1 // pred_check
      _
    $region75: #{all_text_bert_forward.1} parent=1 // pred_check_branch
      %874 = sbr.rel (0) target = $region77
    $region76: #{all_text_bert_forward.1} parent=1 // pred_region
      %s876 = ssub.s32 32, 32
      %877 = vsyncadd [#allocation3], %s876
      %s879 = sshll.u32 [#allocation2], 4
      %s880 = int_to_ptr.vmem [resolvable:$true] %s879
      %882 = dma.vmem_to_hbm [thread:$0]  %s880, 32, %s18, [#allocation3]
    $region77: #{all_text_bert_forward.1} parent=1 // pred_fallthru
      _
    // Predicated region
    $region78: #{all_text_bert_forward.1} parent=1 // pred_check
      _
    $region79: #{all_text_bert_forward.1} parent=1 // pred_check_branch
      %884 = sbr.rel (0) target = $region81
    $region80: #{all_text_bert_forward.1} parent=1 // pred_region
      %s886 = ssub.s32 32, 32
      %887 = vsyncadd [#allocation5], %s886
      %s889 = sshll.u32 [#allocation4], 4
      %s890 = int_to_ptr.vmem [resolvable:$true] %s889
      %892 = dma.vmem_to_hbm [thread:$0]  %s890, 32, %s19, [#allocation5]
    $region81: #{all_text_bert_forward.1} parent=1 // pred_fallthru
      _
    // Predicated region
    $region82: #{all_text_bert_forward.1} parent=1 // pred_check
      _
    $region83: #{all_text_bert_forward.1} parent=1 // pred_check_branch
      %894 = sbr.rel (0) target = $region85
    $region84: #{all_text_bert_forward.1} parent=1 // pred_region
      %895 = dma.done [#allocation3], 32
    $region85: #{all_text_bert_forward.1} parent=1 // pred_fallthru
      _
    // Predicated region
    $region86: #{all_text_bert_forward.1} parent=1 // pred_check
      _
    $region87: #{all_text_bert_forward.1} parent=1 // pred_check_branch
      %897 = sbr.rel (0) target = $region89
    $region88: #{all_text_bert_forward.1} parent=1 // pred_region
      %898 = dma.done [#allocation5], 32
    $region89: #{all_text_bert_forward.1} parent=1 // pred_fallthru
      _
    %899 = vsyncpa [#allocation3], 1
    %900 = vsyncpa [#allocation5], 1

</llo_original>
